<compile_context>
chip_gen: v7x
topology: tpu7x:2x2x1
jax: 0.10.0
libtpu: 0.0.40
codegen_flags: <defaults>
</compile_context>

<pallas_src>
import functools

import jax
import jax.numpy as jnp
from jax.experimental import pallas as pl
from jax.experimental.pallas import tpu as pltpu

_LANES = 128


def _unified_attention_kernel(seed_ref, *refs, channels, group, gen_weights,
                              use_matmul):
    """softmax over aligned channel groups, times x, on one (rows, width) block."""
    idx = 0
    if use_matmul:
        gones_ref = refs[idx]; idx += 1          # resident block-diagonal ones (bf16)
    if not gen_weights:
        w_ref = refs[idx]; idx += 1
    x_ref = refs[idx]
    att_ref, sc_ref = refs[idx + 1], refs[idx + 2]

    x = x_ref[...].astype(jnp.float32)
    width = x.shape[-1]

    if gen_weights:
        # Fresh N(0,1) weights drawn on-chip (the module draws a new randn
        # Parameter every forward); per-block seed offset keeps streams
        # independent across grid steps.
        # NOTE(v7x): stateful_normal and the softmax exp share the single EUP
        # pipe; if profiling shows EUP binding there, switch to host-side
        # weights or a cheaper bits->normal transform.
        pltpu.prng_seed(seed_ref[0] + pl.program_id(0))
        w = pltpu.stateful_normal(x.shape, jnp.float32)
    else:
        w = w_ref[...].astype(jnp.float32)

    if channels != group:
        # The wrapper padded the channel dim up to `group`; push pad channels
        # to -inf so they carry zero probability mass.  (Only built when
        # padding is actually present.)
        lane = jax.lax.broadcasted_iota(jnp.int32, (1, width), 1)
        w = jnp.where(lane % group < channels, w, jnp.float32(-1e30))

    # Row-wide max: a single constant shared by every channel group in the row,
    # so each per-group softmax is unchanged.  Safe for the module's N(0,1)
    # weights (per-group max would only matter for adversarial user weights
    # spanning >~87 within one 128-lane row).
    m = jnp.max(w, axis=-1, keepdims=True)
    e = jnp.exp(w - m)

    if use_matmul:
        # Per-group sum, broadcast to every lane of its group, as one
        # block-diagonal ones matmul.  The ones matrix is hoisted (host-built,
        # VMEM-resident) and both operands are bf16 -> single-pass on the MXU.
        denom = jnp.dot(e.astype(jnp.bfloat16), gones_ref[...],
                        preferred_element_type=jnp.float32)
    else:
        # Full-row softmax (channels span the entire last dim).
        denom = jnp.sum(e, axis=-1, keepdims=True)

    # EUP approximate reciprocal instead of a VALU divide sequence.
    scores = e * pl.reciprocal(denom, approx=True)
    sc_ref[...] = scores.astype(sc_ref.dtype)
    att_ref[...] = (scores * x).astype(att_ref.dtype)


@functools.lru_cache(maxsize=None)
def _vmem_budget():
    """(vmem_limit_bytes, per-I/O-buffer cap bytes) chosen per TPU generation."""
    try:
        vmem = pltpu.get_tpu_info().vmem_capacity_bytes
    except Exception:
        vmem = None
    if vmem is not None and vmem > 96 * 1024 * 1024:
        # v5e / v6e: 128 MiB physical VMEM -> longer DMAs, fewer grid steps.
        return 64 * 1024 * 1024, 2 * 1024 * 1024
    # v7x (64 MiB per TC) or unknown build: keep the scoped limit <= ~48 MiB.
    # The body also holds ~5 tile-sized f32 temporaries (w, e, denom, scores,
    # x) on top of the 6-8 double-buffered I/O tiles, so cap each I/O tile at
    # 1 MiB (total footprint stays well under the limit).
    return 48 * 1024 * 1024, 1 * 1024 * 1024


def _pick_row_tile(num_rows, width, itemsize, max_block_bytes, min_steps=4):
    """Rows per block: whole array when tiny, otherwise a multiple of 8 sized
    so (a) each double-buffered I/O tile stays under `max_block_bytes` and
    (b) the grid has >= `min_steps` steps, letting the v7x megacore shard the
    'parallel' row axis and keeping DMA/compute overlap per core."""
    if num_rows <= 8:
        return num_rows
    cap = max(8, (max_block_bytes // max(width * itemsize, 1)) // 8 * 8)
    target = max(8, pl.cdiv(num_rows, min_steps) // 8 * 8)
    return min(cap, target)


def unified_attention_dynamic(x, seed, attn_weights=None):
    """softmax(attn_weights, axis=-1) * x for x of shape [nodes, seq, channels].

    If `attn_weights` is None the weights are drawn in-kernel from the TPU PRNG
    seeded by `seed` (int32 array of shape (1,)).  Returns (attended, scores),
    both shaped like x; scores are emitted in x.dtype.
    """
    n, s, c = x.shape
    gen_weights = attn_weights is None

    # Channel-group geometry for the lane-dense view.
    if c <= _LANES:
        group = 1 << max(c - 1, 0).bit_length()   # next pow2 >= c (divides 128)
        width = _LANES
    else:
        group = pl.cdiv(c, _LANES) * _LANES        # one softmax group per row
        width = group
    use_matmul = group < width
    c_pad = group

    # Channel padding (only when c is not already the group size).
    if c_pad != c:
        pad = ((0, 0), (0, 0), (0, c_pad - c))
        x_work = jnp.pad(x, pad)
        w_work = None if gen_weights else jnp.pad(attn_weights, pad)
    else:
        x_work, w_work = x, attn_weights

    total = n * s * c_pad
    rows_raw = pl.cdiv(total, width)
    itemsize = jnp.dtype(x.dtype).itemsize
    vmem_limit, buf_cap = _vmem_budget()
    tile_rows = _pick_row_tile(rows_raw, width, itemsize, buf_cap)
    rows = pl.cdiv(rows_raw, tile_rows) * tile_rows   # pad rows -> no partial blocks
    grid = (rows // tile_rows,)

    def to2d(a):
        flat = a.reshape(-1)
        if rows * width != total:
            flat = jnp.pad(flat, (0, rows * width - total))
        return flat.reshape(rows, width)

    spec = pl.BlockSpec((tile_rows, width), lambda i, _seed: (i, 0))
    in_specs, operands = [], []
    if use_matmul:
        # Hoisted block-diagonal ones (sum within aligned channel groups):
        # built once on the host, bf16, resident in VMEM (index_map -> (0,0)).
        gidx = jnp.arange(width, dtype=jnp.int32) // group
        group_ones = (gidx[:, None] == gidx[None, :]).astype(jnp.bfloat16)
        in_specs.append(pl.BlockSpec((width, width), lambda i, _seed: (0, 0)))
        operands.append(group_ones)
    if not gen_weights:
        in_specs.append(spec)
        operands.append(to2d(w_work))
    in_specs.append(spec)
    operands.append(to2d(x_work))

    kernel = functools.partial(
        _unified_attention_kernel,
        channels=c, group=group, gen_weights=gen_weights, use_matmul=use_matmul)

    attended2, scores2 = pl.pallas_call(
        kernel,
        out_shape=(
            jax.ShapeDtypeStruct((rows, width), x.dtype),
            jax.ShapeDtypeStruct((rows, width), x.dtype),
        ),
        grid_spec=pltpu.PrefetchScalarGridSpec(
            num_scalar_prefetch=1,
            grid=grid,
            in_specs=in_specs,
            out_specs=(spec, spec),
        ),
        compiler_params=pltpu.CompilerParams(
            dimension_semantics=("parallel",),
            vmem_limit_bytes=vmem_limit,
        ),
    )(seed, *operands)

    def from2d(a2):
        out = a2.reshape(-1)[:total].reshape(n, s, c_pad)
        return out[..., :c] if c_pad != c else out

    return from2d(attended2), from2d(scores2)


@functools.lru_cache(maxsize=None)
def _in_kernel_rng_available():
    """Probe the in-kernel stateful-PRNG path exactly once (never per call)."""
    try:
        probe = unified_attention_dynamic(
            jnp.ones((1, 2, 4), jnp.float32), jnp.zeros((1,), jnp.int32))
        jax.block_until_ready(probe)
        return True
    except Exception:
        return False


class A3TGCNUnifiedAutoencoderDynamicPallas:
    """JAX/Pallas port of A3TGCNUnifiedAutoencoderDynamic (forward semantics).

    The reference forward only runs UnifiedAttentionDynamic; the A3TGCN cell
    and the decoder Linear are declared in __init__ but never reached."""

    def __init__(self, in_channels, hidden_channels, out_channels, key):
        self.in_channels = in_channels
        self.hidden_channels = hidden_channels
        self.out_channels = out_channels
        # Decoder Linear(hidden, out) parameters: declared for fidelity with
        # the reference __init__, unused by its forward body.
        k_w, k_b = jax.random.split(key)
        bound = 1.0 / float(hidden_channels) ** 0.5
        self.decoder_w = jax.random.uniform(
            k_w, (out_channels, hidden_channels), jnp.float32, -bound, bound)
        self.decoder_b = jax.random.uniform(
            k_b, (out_channels,), jnp.float32, -bound, bound)
        # TODO(synk): A3TGCN is an external (undefined-here) class and is never
        # invoked by the reference forward; it is not instantiated.
        # Probe the in-kernel RNG path once at init; __call__ never syncs.
        self.rng_in_kernel = _in_kernel_rng_available()

    def __call__(self, x_seq, edge_index_seq, attn_key):
        del edge_index_seq  # unused by the reference forward
        if self.rng_in_kernel:
            # The module draws a fresh randn Parameter every call; reproduce it
            # with a per-call seed derived from attn_key.  (In-kernel draws
            # depend on the chosen tiling; feed host weights below if exact
            # cross-chip reproducibility is required.)
            seed = jax.random.randint(
                attn_key, (1,), 0, jnp.iinfo(jnp.int32).max, dtype=jnp.int32)
            return unified_attention_dynamic(x_seq, seed)
        # TODO(synk): fallback for builds without pltpu.stateful_normal —
        # host-side randn weights through the same lane-dense kernel.
        w = jax.random.normal(attn_key, x_seq.shape, jnp.float32)
        return unified_attention_dynamic(
            x_seq, jnp.zeros((1,), jnp.int32), attn_weights=w)


if __name__ == "__main__":
    key = jax.random.PRNGKey(0)
    k_model, k_x, k_attn = jax.random.split(key, 3)

    num_nodes, seq_len, in_channels = 16, 8, 4
    hidden_channels, out_channels = 32, 4

    x_seq = jax.random.normal(k_x, (num_nodes, seq_len, in_channels), jnp.float32)
    # edge_index: [2, num_edges] int32 (unused by the forward, kept for fidelity)
    edge_index_seq = jnp.stack([
        jnp.arange(num_nodes, dtype=jnp.int32),
        (jnp.arange(num_nodes, dtype=jnp.int32) + 1) % num_nodes,
    ])

    model = A3TGCNUnifiedAutoencoderDynamicPallas(
        in_channels, hidden_channels, out_channels, k_model)

    attended_x, attn_scores = model(x_seq, edge_index_seq, k_attn)
    jax.block_until_ready((attended_x, attn_scores))

    # Structural correctness: a valid per-(node, step) softmax over channels
    # and elementwise gating of x.  Tolerance 1e-2 absorbs the bf16 group-sum
    # and EUP approximate-reciprocal rounding across TPU generations.
    assert attended_x.shape == x_seq.shape
    assert attn_scores.shape == x_seq.shape
    assert attn_scores.dtype == x_seq.dtype
    assert bool(jnp.all(attn_scores > 0.0))
    assert bool(jnp.all(attn_scores < 1.01))
    assert bool(jnp.all(jnp.abs(jnp.sum(attn_scores, axis=-1) - 1.0) < 1e-2))
    assert bool(jnp.all(jnp.abs(attended_x - attn_scores * x_seq) < 1e-5))

    # Numeric cross-check of the lane-dense grouped kernel against the pure-JAX
    # reference with known host-side weights (same kernel path as production).
    w_host = jax.random.normal(k_attn, x_seq.shape, jnp.float32)
    att_h, sc_h = unified_attention_dynamic(
        x_seq, jnp.zeros((1,), jnp.int32), attn_weights=w_host)
    sc_ref = jax.nn.softmax(w_host, axis=-1)
    assert bool(jnp.all(jnp.abs(sc_h - sc_ref) < 1e-2))
    assert bool(jnp.all(jnp.abs(att_h - sc_ref * x_seq) < 1e-2))

    print("KERNEL_OK")
</pallas_src>

<mosaic_0001>
module attributes {stable_mosaic.version = 11 : i64} {
  func.func @_unified_attention_kernel(%arg0: i32, %arg1: memref<1xi32, #tpu.memory_space<smem>>, %arg2: memref<128x128xbf16, #tpu.memory_space<vmem>>, %arg3: memref<1x128xf32, #tpu.memory_space<vmem>>, %arg4: memref<1x128xf32, #tpu.memory_space<vmem>>, %arg5: memref<1x128xf32, #tpu.memory_space<vmem>>) attributes {dimension_semantics = [#tpu.dimension_semantics<parallel>], iteration_bounds = array<i64: 1>, scalar_prefetch = 1 : i64, scratch_operands = 0 : i64, tpu.core_type = #tpu.core_type<tc>, window_params = [{pipeline_mode = #tpu.pipeline_mode<synchronous>, transform_indices = @transform_0, window_bounds = array<i64: 128, 128>}, {transform_indices = @transform_1, window_bounds = array<i64: 1, 128>}, {transform_indices = @transform_2, window_bounds = array<i64: 1, 128>}, {transform_indices = @transform_3, window_bounds = array<i64: 1, 128>}]} {
    %c0 = arith.constant 0 : index
    %c0_0 = arith.constant 0 : index
    %0 = vector.load %arg3[%c0, %c0_0] : memref<1x128xf32, #tpu.memory_space<vmem>>, vector<1x128xf32>
    %c0_1 = arith.constant 0 : index
    %1 = memref.load %arg1[%c0_1] : memref<1xi32, #tpu.memory_space<smem>>
    %2 = arith.addi %1, %arg0 : i32
    "tpu.prng_set_seed_32"(%2) : (i32) -> ()
    %c0_i32 = arith.constant 0 : i32
    %c0_i32_2 = arith.constant 0 : i32
    %cst = arith.constant -0.99999994 : f32
    %cst_3 = arith.constant 1.000000e+00 : f32
    %3 = vector.broadcast %cst : f32 to vector<1x1xf32>
    %4 = vector.broadcast %cst_3 : f32 to vector<1x1xf32>
    %5 = "tpu.prng_random_bits"() : () -> vector<1x128xi32>
    %c9_i32 = arith.constant 9 : i32
    %6 = vector.broadcast %c9_i32 : i32 to vector<1x128xi32>
    %7 = arith.shrui %5, %6 : vector<1x128xi32>
    %c1065353216_i32 = arith.constant 1065353216 : i32
    %8 = vector.broadcast %c1065353216_i32 : i32 to vector<1x128xi32>
    %9 = arith.ori %7, %8 : vector<1x128xi32>
    %10 = tpu.bitcast %9 : vector<1x128xi32> -> vector<1x128xf32>
    %cst_4 = arith.constant 1.000000e+00 : f32
    %11 = vector.broadcast %cst_4 : f32 to vector<1x128xf32>
    %12 = arith.subf %10, %11 : vector<1x128xf32>
    %13 = arith.subf %4, %3 : vector<1x1xf32>
    %14 = vector.broadcast %13 : vector<1x1xf32> to vector<1x128xf32>
    %15 = arith.mulf %12, %14 : vector<1x128xf32>
    %16 = vector.broadcast %3 : vector<1x1xf32> to vector<1x128xf32>
    %17 = arith.addf %15, %16 : vector<1x128xf32>
    %18 = vector.broadcast %3 : vector<1x1xf32> to vector<1x128xf32>
    %19 = arith.maximumf %18, %17 : vector<1x128xf32>
    %cst_5 = arith.constant 0.000000e+00 : f32
    %20 = vector.broadcast %cst_5 : f32 to vector<1x128xf32>
    %21 = arith.subf %20, %19 : vector<1x128xf32>
    %22 = arith.mulf %19, %21 : vector<1x128xf32>
    %23 = math.log1p %22 : vector<1x128xf32>
    %cst_6 = arith.constant 0.000000e+00 : f32
    %24 = vector.broadcast %cst_6 : f32 to vector<1x128xf32>
    %25 = arith.subf %24, %23 : vector<1x128xf32>
    %cst_7 = arith.constant 5.000000e+00 : f32
    %26 = vector.broadcast %cst_7 : f32 to vector<1x128xf32>
    %27 = arith.cmpf olt, %25, %26 : vector<1x128xf32>
    %cst_8 = arith.constant 2.500000e+00 : f32
    %28 = vector.broadcast %cst_8 : f32 to vector<1x128xf32>
    %29 = arith.subf %25, %28 : vector<1x128xf32>
    %30 = math.sqrt %25 : vector<1x128xf32>
    %cst_9 = arith.constant 3.000000e+00 : f32
    %31 = vector.broadcast %cst_9 : f32 to vector<1x128xf32>
    %32 = arith.subf %30, %31 : vector<1x128xf32>
    %33 = arith.select %27, %29, %32 : vector<1x128xi1>, vector<1x128xf32>
    %cst_10 = arith.constant 2.81022636E-8 : f32
    %cst_11 = arith.constant -2.00214257E-4 : f32
    %34 = vector.broadcast %cst_10 : f32 to vector<1x128xf32>
    %35 = vector.broadcast %cst_11 : f32 to vector<1x128xf32>
    %36 = arith.select %27, %34, %35 : vector<1x128xi1>, vector<1x128xf32>
    %cst_12 = arith.constant 3.43273939E-7 : f32
    %cst_13 = arith.constant 1.00950558E-4 : f32
    %37 = vector.broadcast %cst_12 : f32 to vector<1x128xf32>
    %38 = vector.broadcast %cst_13 : f32 to vector<1x128xf32>
    %39 = arith.select %27, %37, %38 : vector<1x128xi1>, vector<1x128xf32>
    %40 = arith.mulf %36, %33 : vector<1x128xf32>
    %41 = arith.addf %39, %40 : vector<1x128xf32>
    %cst_14 = arith.constant -3.5233877E-6 : f32
    %cst_15 = arith.constant 0.00134934322 : f32
    %42 = vector.broadcast %cst_14 : f32 to vector<1x128xf32>
    %43 = vector.broadcast %cst_15 : f32 to vector<1x128xf32>
    %44 = arith.select %27, %42, %43 : vector<1x128xi1>, vector<1x128xf32>
    %45 = arith.mulf %41, %33 : vector<1x128xf32>
    %46 = arith.addf %44, %45 : vector<1x128xf32>
    %cst_16 = arith.constant -4.39150654E-6 : f32
    %cst_17 = arith.constant -0.00367342844 : f32
    %47 = vector.broadcast %cst_16 : f32 to vector<1x128xf32>
    %48 = vector.broadcast %cst_17 : f32 to vector<1x128xf32>
    %49 = arith.select %27, %47, %48 : vector<1x128xi1>, vector<1x128xf32>
    %50 = arith.mulf %46, %33 : vector<1x128xf32>
    %51 = arith.addf %49, %50 : vector<1x128xf32>
    %cst_18 = arith.constant 2.1858087E-4 : f32
    %cst_19 = arith.constant 0.00573950773 : f32
    %52 = vector.broadcast %cst_18 : f32 to vector<1x128xf32>
    %53 = vector.broadcast %cst_19 : f32 to vector<1x128xf32>
    %54 = arith.select %27, %52, %53 : vector<1x128xi1>, vector<1x128xf32>
    %55 = arith.mulf %51, %33 : vector<1x128xf32>
    %56 = arith.addf %54, %55 : vector<1x128xf32>
    %cst_20 = arith.constant -0.00125372503 : f32
    %cst_21 = arith.constant -0.0076224613 : f32
    %57 = vector.broadcast %cst_20 : f32 to vector<1x128xf32>
    %58 = vector.broadcast %cst_21 : f32 to vector<1x128xf32>
    %59 = arith.select %27, %57, %58 : vector<1x128xi1>, vector<1x128xf32>
    %60 = arith.mulf %56, %33 : vector<1x128xf32>
    %61 = arith.addf %59, %60 : vector<1x128xf32>
    %cst_22 = arith.constant -0.00417768164 : f32
    %cst_23 = arith.constant 0.00943887047 : f32
    %62 = vector.broadcast %cst_22 : f32 to vector<1x128xf32>
    %63 = vector.broadcast %cst_23 : f32 to vector<1x128xf32>
    %64 = arith.select %27, %62, %63 : vector<1x128xi1>, vector<1x128xf32>
    %65 = arith.mulf %61, %33 : vector<1x128xf32>
    %66 = arith.addf %64, %65 : vector<1x128xf32>
    %cst_24 = arith.constant 0.246640727 : f32
    %cst_25 = arith.constant 1.00167406 : f32
    %67 = vector.broadcast %cst_24 : f32 to vector<1x128xf32>
    %68 = vector.broadcast %cst_25 : f32 to vector<1x128xf32>
    %69 = arith.select %27, %67, %68 : vector<1x128xi1>, vector<1x128xf32>
    %70 = arith.mulf %66, %33 : vector<1x128xf32>
    %71 = arith.addf %69, %70 : vector<1x128xf32>
    %cst_26 = arith.constant 1.50140941 : f32
    %cst_27 = arith.constant 2.83297682 : f32
    %72 = vector.broadcast %cst_26 : f32 to vector<1x128xf32>
    %73 = vector.broadcast %cst_27 : f32 to vector<1x128xf32>
    %74 = arith.select %27, %72, %73 : vector<1x128xi1>, vector<1x128xf32>
    %75 = arith.mulf %71, %33 : vector<1x128xf32>
    %76 = arith.addf %74, %75 : vector<1x128xf32>
    %77 = math.absf %19 : vector<1x128xf32>
    %cst_28 = arith.constant 1.000000e+00 : f32
    %78 = vector.broadcast %cst_28 : f32 to vector<1x128xf32>
    %79 = arith.cmpf oeq, %77, %78 : vector<1x128xf32>
    %cst_29 = arith.constant 0x7F800000 : f32
    %80 = vector.broadcast %cst_29 : f32 to vector<1x128xf32>
    %81 = arith.mulf %80, %19 : vector<1x128xf32>
    %82 = arith.mulf %76, %19 : vector<1x128xf32>
    %83 = arith.select %79, %81, %82 : vector<1x128xi1>, vector<1x128xf32>
    %cst_30 = arith.constant 1.41421354 : f32
    %84 = vector.broadcast %cst_30 : f32 to vector<1x128xf32>
    %85 = arith.mulf %84, %83 : vector<1x128xf32>
    %cst_31 = arith.constant dense<0xFF800000> : vector<1xf32>
    %86 = vector.multi_reduction <maximumf>, %85, %cst_31 [1] : vector<1x128xf32> to vector<1xf32>
    %87 = vector.shape_cast %86 : vector<1xf32> to vector<1x1xf32>
    %88 = vector.broadcast %87 : vector<1x1xf32> to vector<1x128xf32>
    %89 = arith.subf %85, %88 : vector<1x128xf32>
    %90 = math.exp %89 : vector<1x128xf32>
    %91 = arith.truncf %90 : vector<1x128xf32> to vector<1x128xbf16>
    %c0_32 = arith.constant 0 : index
    %c0_33 = arith.constant 0 : index
    %92 = vector.load %arg2[%c0_32, %c0_33] : memref<128x128xbf16, #tpu.memory_space<vmem>>, vector<128x128xbf16>
    %cst_34 = arith.constant dense<0.000000e+00> : vector<1x128xf32>
    %93 = tpu.matmul %91, %92, %cst_34 {dimension_numbers = #tpu.dot_dimension_numbers<[1], [0], [0], [1], [0, 0, 1, 1], [], []>} : vector<1x128xbf16>, vector<128x128xbf16>, vector<1x128xf32> -> vector<1x128xf32>
    %94 = tpu.reciprocal %93 {approx = true} : vector<1x128xf32> -> vector<1x128xf32>
    %95 = arith.mulf %90, %94 : vector<1x128xf32>
    %c0_35 = arith.constant 0 : index
    %c0_36 = arith.constant 0 : index
    %96 = vector.load %arg5[%c0_35, %c0_36] : memref<1x128xf32, #tpu.memory_space<vmem>>, vector<1x128xf32>
    tpu.vector_store %arg5[%c0_35, %c0_36], %95 {strides = array<i32>} : memref<1x128xf32, #tpu.memory_space<vmem>>, vector<1x128xf32>,
    %97 = arith.mulf %95, %0 : vector<1x128xf32>
    %c0_37 = arith.constant 0 : index
    %c0_38 = arith.constant 0 : index
    %98 = vector.load %arg4[%c0_37, %c0_38] : memref<1x128xf32, #tpu.memory_space<vmem>>, vector<1x128xf32>
    tpu.vector_store %arg4[%c0_37, %c0_38], %97 {strides = array<i32>} : memref<1x128xf32, #tpu.memory_space<vmem>>, vector<1x128xf32>,
    return
  }
  func.func @transform_0(%arg0: i32, %arg1: memref<1xi32, #tpu.memory_space<smem>>) -> (i32, i32) {
    %c0_i32 = arith.constant 0 : i32
    %c0_i32_0 = arith.constant 0 : i32
    %c0_i32_1 = arith.constant 0 : i32
    return %c0_i32, %c0_i32_0 : i32, i32
  }
  func.func @transform_1(%arg0: i32, %arg1: memref<1xi32, #tpu.memory_space<smem>>) -> (i32, i32) {
    %c0_i32 = arith.constant 0 : i32
    %c0_i32_0 = arith.constant 0 : i32
    return %arg0, %c0_i32 : i32, i32
  }
  func.func @transform_2(%arg0: i32, %arg1: memref<1xi32, #tpu.memory_space<smem>>) -> (i32, i32) {
    %c0_i32 = arith.constant 0 : i32
    %c0_i32_0 = arith.constant 0 : i32
    return %arg0, %c0_i32 : i32, i32
  }
  func.func @transform_3(%arg0: i32, %arg1: memref<1xi32, #tpu.memory_space<smem>>) -> (i32, i32) {
    %c0_i32 = arith.constant 0 : i32
    %c0_i32_0 = arith.constant 0 : i32
    return %arg0, %c0_i32 : i32, i32
  }
}

module attributes {stable_mosaic.version = 11 : i64} {
  func.func @_unified_attention_kernel(%arg0: i32, %arg1: memref<1xi32, #tpu.memory_space<smem>>, %arg2: memref<128x128xbf16, #tpu.memory_space<vmem>>, %arg3: memref<4x128xf32, #tpu.memory_space<vmem>>, %arg4: memref<4x128xf32, #tpu.memory_space<vmem>>, %arg5: memref<4x128xf32, #tpu.memory_space<vmem>>, %arg6: memref<4x128xf32, #tpu.memory_space<vmem>>) attributes {dimension_semantics = [#tpu.dimension_semantics<parallel>], iteration_bounds = array<i64: 1>, scalar_prefetch = 1 : i64, scratch_operands = 0 : i64, tpu.core_type = #tpu.core_type<tc>, window_params = [{pipeline_mode = #tpu.pipeline_mode<synchronous>, transform_indices = @transform_0, window_bounds = array<i64: 128, 128>}, {transform_indices = @transform_1, window_bounds = array<i64: 4, 128>}, {transform_indices = @transform_2, window_bounds = array<i64: 4, 128>}, {transform_indices = @transform_3, window_bounds = array<i64: 4, 128>}, {transform_indices = @transform_4, window_bounds = array<i64: 4, 128>}]} {
    %c0 = arith.constant 0 : index
    %c0_0 = arith.constant 0 : index
    %0 = vector.load %arg4[%c0, %c0_0] : memref<4x128xf32, #tpu.memory_space<vmem>>, vector<4x128xf32>
    %c0_1 = arith.constant 0 : index
    %c0_2 = arith.constant 0 : index
    %1 = vector.load %arg3[%c0_1, %c0_2] : memref<4x128xf32, #tpu.memory_space<vmem>>, vector<4x128xf32>
    %cst = arith.constant dense<0xFF800000> : vector<4xf32>
    %2 = vector.multi_reduction <maximumf>, %1, %cst [1] : vector<4x128xf32> to vector<4xf32>
    %3 = vector.shape_cast %2 : vector<4xf32> to vector<4x1xf32>
    %4 = vector.broadcast %3 : vector<4x1xf32> to vector<4x128xf32>
    %5 = arith.subf %1, %4 : vector<4x128xf32>
    %6 = math.exp %5 : vector<4x128xf32>
    %7 = arith.truncf %6 : vector<4x128xf32> to vector<4x128xbf16>
    %c0_3 = arith.constant 0 : index
    %c0_4 = arith.constant 0 : index
    %8 = vector.load %arg2[%c0_3, %c0_4] : memref<128x128xbf16, #tpu.memory_space<vmem>>, vector<128x128xbf16>
    %cst_5 = arith.constant dense<0.000000e+00> : vector<4x128xf32>
    %9 = tpu.matmul %7, %8, %cst_5 {dimension_numbers = #tpu.dot_dimension_numbers<[1], [0], [0], [1], [0, 0, 1, 1], [], []>} : vector<4x128xbf16>, vector<128x128xbf16>, vector<4x128xf32> -> vector<4x128xf32>
    %10 = tpu.reciprocal %9 {approx = true} : vector<4x128xf32> -> vector<4x128xf32>
    %11 = arith.mulf %6, %10 : vector<4x128xf32>
    %c0_6 = arith.constant 0 : index
    %c0_7 = arith.constant 0 : index
    %12 = vector.load %arg6[%c0_6, %c0_7] : memref<4x128xf32, #tpu.memory_space<vmem>>, vector<4x128xf32>
    tpu.vector_store %arg6[%c0_6, %c0_7], %11 {strides = array<i32>} : memref<4x128xf32, #tpu.memory_space<vmem>>, vector<4x128xf32>,
    %13 = arith.mulf %11, %0 : vector<4x128xf32>
    %c0_8 = arith.constant 0 : index
    %c0_9 = arith.constant 0 : index
    %14 = vector.load %arg5[%c0_8, %c0_9] : memref<4x128xf32, #tpu.memory_space<vmem>>, vector<4x128xf32>
    tpu.vector_store %arg5[%c0_8, %c0_9], %13 {strides = array<i32>} : memref<4x128xf32, #tpu.memory_space<vmem>>, vector<4x128xf32>,
    return
  }
  func.func @transform_0(%arg0: i32, %arg1: memref<1xi32, #tpu.memory_space<smem>>) -> (i32, i32) {
    %c0_i32 = arith.constant 0 : i32
    %c0_i32_0 = arith.constant 0 : i32
    %c0_i32_1 = arith.constant 0 : i32
    return %c0_i32, %c0_i32_0 : i32, i32
  }
  func.func @transform_1(%arg0: i32, %arg1: memref<1xi32, #tpu.memory_space<smem>>) -> (i32, i32) {
    %c0_i32 = arith.constant 0 : i32
    %c0_i32_0 = arith.constant 0 : i32
    return %arg0, %c0_i32 : i32, i32
  }
  func.func @transform_2(%arg0: i32, %arg1: memref<1xi32, #tpu.memory_space<smem>>) -> (i32, i32) {
    %c0_i32 = arith.constant 0 : i32
    %c0_i32_0 = arith.constant 0 : i32
    return %arg0, %c0_i32 : i32, i32
  }
  func.func @transform_3(%arg0: i32, %arg1: memref<1xi32, #tpu.memory_space<smem>>) -> (i32, i32) {
    %c0_i32 = arith.constant 0 : i32
    %c0_i32_0 = arith.constant 0 : i32
    return %arg0, %c0_i32 : i32, i32
  }
  func.func @transform_4(%arg0: i32, %arg1: memref<1xi32, #tpu.memory_space<smem>>) -> (i32, i32) {
    %c0_i32 = arith.constant 0 : i32
    %c0_i32_0 = arith.constant 0 : i32
    return %arg0, %c0_i32 : i32, i32
  }
}

</mosaic_0001>

<llo_original>
// kernel: tpu_custom_call.1
$region0: #{tpu_custom_call.1}
  #allocation0 [shape = 'u32[]', space=smem, size = 0x4, offset = 0x4, fixed_abs, tag = 'smem constant byte address 0x4 - core index']
  #allocation1 [shape = 'u32[144,128]{1,0:T(1,128)}', space=vmem, size = 0x12000, scoped, tag = 'internal scratch']
  #allocation2 [shape = 's32[1]{0}', space=sflag, size = 0x4, scoped, tag = 'scoped memory for tpu_custom_call.1']
  #allocation3 [shape = 's32[1]{0:T(128)S(6)}', space=smem, size = 0x200, scoped, tag = 'prefetched SMEM operand 0']
  %s0 = inlined_call_operand.<no memory space> [shape: s32[1], index: 0, kind: input, shape index: {}]
  %s1 = inlined_call_operand.hbm [shape: bf16[128,128], index: 1, kind: input, shape index: {}]
  %s2 = inlined_call_operand.vmem [shape: f32[1,128], index: 2, kind: input, shape index: {}]
  %s3 = inlined_call_operand.hbm [shape: f32[1,128], index: 3, kind: output, shape index: {0}]
  %s4 = inlined_call_operand.hbm [shape: f32[1,128], index: 4, kind: output, shape index: {1}]
  %5 = xla_tuple %s3, %s4
  %s6 = sld [smem:[#allocation0]]
  $region30: #{tpu_custom_call.1} parent=0
    _
  %s8 = ssub.s32 1, %s6
  %s9 = scalar_select 0, %s8, %s6
  %10 = sst [smem:[#allocation3]] %s0
  $region1: #{tpu_custom_call.1} parent=0
    #allocation4 [shape = 'u8[32768]{0}', space=vmem, size = 0x8000, scoped, tag = 'input window, operand 1, single buffered']
    #allocation5 [shape = 's32[1]{0}', space=sflag, size = 0x4, scoped, tag = 'scoped memory for tpu_custom_call.1']
    #allocation6 [shape = 's32[1]{0}', space=sflag, size = 0x4, scoped, tag = 'scoped memory for tpu_custom_call.1']
    #allocation7 [shape = 'u8[512]{0}', space=vmem, size = 0x400, scoped, tag = 'output window, operand 0, single buffered']
    #allocation8 [shape = 'u8[512]{0}', space=vmem, size = 0x400, scoped, tag = 'output window, operand 1, single buffered']
    #allocation9 [shape = 's32[1]{0}', space=sflag, size = 0x4, scoped, tag = 'scoped memory for tpu_custom_call.1']
    %11 = vsyncpa [#allocation5], 0
    %12 = vsyncpa [#allocation6], 0
    %13 = vsyncpa [#allocation9], 0
    // Predicated region
    $region2: #{tpu_custom_call.1} parent=1 // pred_check
      _
    $region3: #{tpu_custom_call.1} parent=1 // pred_check_branch
      %15 = sbr.rel (0) target = $region5
    $region4: #{tpu_custom_call.1} parent=1 // pred_region
      %s17 = ssub.s32 1024, 1024
      %18 = vsyncadd [#allocation5], %s17
      %s19 = sshll.u32 [#allocation4], 4
      %s20 = int_to_ptr.vmem [resolvable:$true] %s19
      %25 = dma.hbm_to_vmem [thread:$0]  %s1, 1024, %s20, [#allocation5], 64, 64, 4
    $region5: #{tpu_custom_call.1} parent=1 // pred_fallthru
      _
    // Predicated region
    $region6: #{tpu_custom_call.1} parent=1 // pred_check
      _
    $region7: #{tpu_custom_call.1} parent=1 // pred_check_branch
      %27 = sbr.rel (0) target = $region9
    $region8: #{tpu_custom_call.1} parent=1 // pred_region
      _
    $region9: #{tpu_custom_call.1} parent=1 // pred_fallthru
      _
    // Predicated region
    $region10: #{tpu_custom_call.1} parent=1 // pred_check
      _
    $region11: #{tpu_custom_call.1} parent=1 // pred_check_branch
      %29 = sbr.rel (0) target = $region13
    $region12: #{tpu_custom_call.1} parent=1 // pred_region
      %30 = dma.done [#allocation5], 1024
    $region13: #{tpu_custom_call.1} parent=1 // pred_fallthru
      _
    %v32 = vld [vmem:[%s2] sm:$0x1]
    %s33 = sld [smem:[#allocation3]]
    %s34 = sadd.s32 %s33, 0
    %v35 = vlaneseq
    %v36 = vstv %s34
    %v37 = vxor.u32 %v36, %v36
    %v38 = vxor.u32 %v37, 466688986
    %v39 = vadd.s32 %v35, %v36
    %v40 = vadd.s32 %v39, %v39
    %v41 = vshll.u32 %v39, 13
    %v42 = vshrl.u32 %v39, 19
    %v43 = vor.u32 %v41, %v42
    %v44 = vxor.u32 %v40, %v43
    %v45 = vadd.s32 %v40, %v44
    %v46 = vshll.u32 %v44, 15
    %v47 = vshrl.u32 %v44, 17
    %v48 = vor.u32 %v46, %v47
    %v49 = vxor.u32 %v45, %v48
    %v50 = vadd.s32 %v45, %v49
    %v51 = vshll.u32 %v49, 26
    %v52 = vshrl.u32 %v49, 6
    %v53 = vor.u32 %v51, %v52
    %v54 = vxor.u32 %v50, %v53
    %v55 = vadd.s32 %v50, %v54
    %v56 = vshll.u32 %v54, 6
    %v57 = vshrl.u32 %v54, 26
    %v58 = vor.u32 %v56, %v57
    %v59 = vxor.u32 %v55, %v58
    %v60 = vadd.s32 %v55, %v36
    %v61 = vadd.s32 %v59, %v38
    %v62 = vadd.s32 %v61, 1
    %v63 = vadd.s32 %v60, %v62
    %v64 = vshll.u32 %v62, 17
    %v65 = vshrl.u32 %v62, 15
    %v66 = vor.u32 %v64, %v65
    %v67 = vxor.u32 %v63, %v66
    %v68 = vadd.s32 %v63, %v67
    %v69 = vshll.u32 %v67, 29
    %v70 = vshrl.u32 %v67, 3
    %v71 = vor.u32 %v69, %v70
    %v72 = vxor.u32 %v68, %v71
    %v73 = vadd.s32 %v68, %v72
    %v74 = vshll.u32 %v72, 16
    %v75 = vshrl.u32 %v72, 16
    %v76 = vor.u32 %v74, %v75
    %v77 = vxor.u32 %v73, %v76
    %v78 = vadd.s32 %v73, %v77
    %v79 = vshll.u32 %v77, 24
    %v80 = vshrl.u32 %v77, 8
    %v81 = vor.u32 %v79, %v80
    %v82 = vxor.u32 %v78, %v81
    %v83 = vadd.s32 %v78, %v38
    %v84 = vadd.s32 %v82, %v36
    %v85 = vadd.s32 %v84, 2
    %v86 = vadd.s32 %v83, %v85
    %v87 = vshll.u32 %v85, 13
    %v88 = vshrl.u32 %v85, 19
    %v89 = vor.u32 %v87, %v88
    %v90 = vxor.u32 %v86, %v89
    %v91 = vadd.s32 %v86, %v90
    %v92 = vshll.u32 %v90, 15
    %v93 = vshrl.u32 %v90, 17
    %v94 = vor.u32 %v92, %v93
    %v95 = vxor.u32 %v91, %v94
    %v96 = vadd.s32 %v91, %v95
    %v97 = vshll.u32 %v95, 26
    %v98 = vshrl.u32 %v95, 6
    %v99 = vor.u32 %v97, %v98
    %v100 = vxor.u32 %v96, %v99
    %v101 = vadd.s32 %v96, %v100
    %v102 = vshll.u32 %v100, 6
    %v103 = vshrl.u32 %v100, 26
    %v104 = vor.u32 %v102, %v103
    %v105 = vxor.u32 %v101, %v104
    %v106 = vadd.s32 %v101, %v36
    %v107 = vadd.s32 %v105, %v36
    %v108 = vadd.s32 %v107, 3
    %v109 = vadd.s32 %v106, %v108
    %v110 = vshll.u32 %v108, 17
    %v111 = vshrl.u32 %v108, 15
    %v112 = vor.u32 %v110, %v111
    %v113 = vxor.u32 %v109, %v112
    %v114 = vadd.s32 %v109, %v113
    %v115 = vshll.u32 %v113, 29
    %v116 = vshrl.u32 %v113, 3
    %v117 = vor.u32 %v115, %v116
    %v118 = vxor.u32 %v114, %v117
    %v119 = vadd.s32 %v114, %v118
    %v120 = vshll.u32 %v118, 16
    %v121 = vshrl.u32 %v118, 16
    %v122 = vor.u32 %v120, %v121
    %v123 = vxor.u32 %v119, %v122
    %v124 = vadd.s32 %v119, %v123
    %v125 = vshll.u32 %v123, 24
    %v126 = vshrl.u32 %v123, 8
    %v127 = vor.u32 %v125, %v126
    %v128 = vxor.u32 %v124, %v127
    %v129 = vadd.s32 %v124, %v36
    %v130 = vadd.s32 %v128, %v38
    %v131 = vadd.s32 %v130, 4
    %v132 = vadd.s32 %v129, %v131
    %v133 = vshll.u32 %v131, 13
    %v134 = vshrl.u32 %v131, 19
    %v135 = vor.u32 %v133, %v134
    %v136 = vxor.u32 %v132, %v135
    %v137 = vadd.s32 %v132, %v136
    %v138 = vshll.u32 %v136, 15
    %v139 = vshrl.u32 %v136, 17
    %v140 = vor.u32 %v138, %v139
    %v141 = vxor.u32 %v137, %v140
    %v142 = vadd.s32 %v137, %v141
    %v143 = vshll.u32 %v141, 26
    %v144 = vshrl.u32 %v141, 6
    %v145 = vor.u32 %v143, %v144
    %v146 = vxor.u32 %v142, %v145
    %v147 = vadd.s32 %v142, %v146
    %v148 = vshll.u32 %v146, 6
    %v149 = vshrl.u32 %v146, 26
    %v150 = vor.u32 %v148, %v149
    %v151 = vxor.u32 %v147, %v150
    %v152 = vadd.s32 %v147, %v38
    %v153 = vadd.s32 %v151, %v36
    %v154 = vadd.s32 %v153, 5
    %v155 = vxor.u32 %v152, %v154
    %156 = set.rngseed %v155
    %v157 = vrng
    %v158 = vshrl.u32 %v157, 9
    %v159 = vor.u32 %v158, 1065353216
    %v161 = vsub.f32 %v159, 1.0
    %v162 = vmul.f32 %v161, 2.0
    %v163 = vadd.f32 %v162, -0.99999994
    %v164 = vmax.f32 %v163, -0.99999994
    %v165 = vsub.f32 0.0, %v164
    %v166 = vmul.f32 %v164, %v165
    %v167 = vadd.f32 %v166, 1.0
    %v168 = vlog2.pop %v167
    %v169 = vmul.f32 %v168, 0.6931472
    %v170 = vmul.f32 -0.5, %v166
    %v171 = vadd.f32 %v170, 1.0
    %v172 = vmul.f32 %v171, %v166
    %v173 = vand.u32 2147483647, %v166
    %vm174 = vcmp.lt.f32.partialorder %v173, 0.0004427343
    %v175 = vsel %vm174, %v172, %v169
    %v176 = vsub.f32 0.0, %v175
    %vm177 = vcmp.lt.f32.partialorder %v176, 5.0
    %v178 = vsub.f32 %v176, 2.5
    %v179 = vrsqrt.pop %v176
    %v180 = vmul.f32 %v176, %v179
    %vm181 = vcmp.eq.f32.partialorder %v176, inf
    %v182 = vsel %vm181, %v176, %v180
    %vm183 = vcmp.eq.f32.partialorder %v176, 0.0
    %v184 = vand.u32 %v176, 2147483648
    %v185 = vsel %vm183, %v184, %v182
    %v186 = vsub.f32 %v185, 3.0
    %v187 = vsel %vm177, %v178, %v186
    %v188 = vsel %vm177, 2.8102264e-08, -0.00020021426
    %v189 = vsel %vm177, 3.4327394e-07, 0.00010095056
    %v190 = vmul.f32 %v188, %v187
    %v191 = vadd.f32 %v189, %v190
    %v192 = vsel %vm177, -3.5233877e-06, 0.0013493432
    %v193 = vmul.f32 %v191, %v187
    %v194 = vadd.f32 %v192, %v193
    %v195 = vsel %vm177, -4.3915065e-06, -0.0036734284
    %v196 = vmul.f32 %v194, %v187
    %v197 = vadd.f32 %v195, %v196
    %v198 = vsel %vm177, 0.00021858087, 0.0057395077
    %v199 = vmul.f32 %v197, %v187
    %v200 = vadd.f32 %v198, %v199
    %v201 = vsel %vm177, -0.001253725, -0.0076224613
    %v202 = vmul.f32 %v200, %v187
    %v203 = vadd.f32 %v201, %v202
    %v204 = vsel %vm177, -0.0041776816, 0.0094388705
    %v205 = vmul.f32 %v203, %v187
    %v206 = vadd.f32 %v204, %v205
    %v207 = vsel %vm177, 0.24664073, 1.001674
    %v208 = vmul.f32 %v206, %v187
    %v209 = vadd.f32 %v207, %v208
    %v210 = vsel %vm177, 1.5014094, 2.8329768
    %v211 = vmul.f32 %v209, %v187
    %v212 = vadd.f32 %v210, %v211
    %v213 = vand.u32 2147483647, %v164
    %vm214 = vcmp.eq.f32.partialorder %v213, 1.0
    %v215 = vmul.f32 %v164, inf
    %v216 = vmul.f32 %v212, %v164
    %v217 = vsel %vm214, %v215, %v216
    %v218 = vmul.f32 %v217, 1.4142135
    %vm219 = vcmask 1040384
    %v220 = vsel %vm219, %v218, -inf
    %221 = vmax.xlane.f32.xlu0 %v220
    %v222 = vpop.xlane.xlu0 %221
    %v223 = vsub.f32 %v218, %v222
    %v224 = vmul.f32 %v223, 1.442695
    %v225 = vpow.pop %v224
    %v226 = vpack.c.bf16 %v225, %v225
    %v227 = vld [vmem:[#allocation4] sm:$0xf]
    %v228 = vld [vmem:[#allocation4 + $0x4] sm:$0xf]
    %v229 = vld [vmem:[#allocation4 + $0x8] sm:$0xf]
    %v230 = vld [vmem:[#allocation4 + $0xc] sm:$0xf]
    %v231 = vld [vmem:[#allocation4 + $0x10] sm:$0xf]
    %v232 = vld [vmem:[#allocation4 + $0x14] sm:$0xf]
    %v233 = vld [vmem:[#allocation4 + $0x18] sm:$0xf]
    %v234 = vld [vmem:[#allocation4 + $0x1c] sm:$0xf]
    %v235 = vld [vmem:[#allocation4 + $0x20] sm:$0xf]
    %v236 = vld [vmem:[#allocation4 + $0x24] sm:$0xf]
    %v237 = vld [vmem:[#allocation4 + $0x28] sm:$0xf]
    %v238 = vld [vmem:[#allocation4 + $0x2c] sm:$0xf]
    %v239 = vld [vmem:[#allocation4 + $0x30] sm:$0xf]
    %v240 = vld [vmem:[#allocation4 + $0x34] sm:$0xf]
    %v241 = vld [vmem:[#allocation4 + $0x38] sm:$0xf]
    %v242 = vld [vmem:[#allocation4 + $0x3c] sm:$0xf]
    %v259 = vunpack.c.l.b16 %v227
    %v260 = vunpack.c.l.b16 %v228
    %v261 = vunpack.c.l.b16 %v229
    %v262 = vunpack.c.l.b16 %v230
    %v263 = vunpack.c.l.b16 %v231
    %v264 = vunpack.c.l.b16 %v232
    %v265 = vunpack.c.l.b16 %v233
    %v266 = vunpack.c.l.b16 %v234
    %v267 = vunpack.c.l.b16 %v235
    %v268 = vunpack.c.l.b16 %v236
    %v269 = vunpack.c.l.b16 %v237
    %v270 = vunpack.c.l.b16 %v238
    %v271 = vunpack.c.l.b16 %v239
    %v272 = vunpack.c.l.b16 %v240
    %v273 = vunpack.c.l.b16 %v241
    %v274 = vunpack.c.l.b16 %v242
    %v275 = vpack.c.b16 %v260, %v259
    %v276 = vpack.c.b16 %v262, %v261
    %v277 = vpack.c.b16 %v264, %v263
    %v278 = vpack.c.b16 %v266, %v265
    %v279 = vpack.c.b16 %v268, %v267
    %v280 = vpack.c.b16 %v270, %v269
    %v281 = vpack.c.b16 %v272, %v271
    %v282 = vpack.c.b16 %v274, %v273
    %291 = vmatprep.subr.bf16.mxu0 0
    %292 = vmatpush1.bf16.msra.mxu0 %v275
    %293 = vmatprep.subr.bf16.mxu0 0
    %294 = vmatpush1.bf16.msra.mxu0 %v276
    %295 = vmatprep.subr.bf16.mxu0 0
    %296 = vmatpush1.bf16.msra.mxu0 %v277
    %297 = vmatprep.subr.bf16.mxu0 0
    %298 = vmatpush1.bf16.msra.mxu0 %v278
    %299 = vmatprep.subr.bf16.mxu0 0
    %300 = vmatpush1.bf16.msra.mxu0 %v279
    %301 = vmatprep.subr.bf16.mxu0 0
    %302 = vmatpush1.bf16.msra.mxu0 %v280
    %303 = vmatprep.subr.bf16.mxu0 0
    %304 = vmatpush1.bf16.msra.mxu0 %v281
    %305 = vmatprep.subr.bf16.mxu0 0
    %306 = vmatpush1.bf16.msra.mxu0 %v282
    %307 = vmatprep.subr.bf16.mxu0 0
    %308 = vmatpush1.bf16.msra.mxu0 0
    %309 = vmatprep.subr.bf16.mxu0 0
    %310 = vmatpush1.bf16.msra.mxu0 0
    %311 = vmatprep.subr.bf16.mxu0 0
    %312 = vmatpush1.bf16.msra.mxu0 0
    %313 = vmatprep.subr.bf16.mxu0 0
    %314 = vmatpush1.bf16.msra.mxu0 0
    %315 = vmatprep.subr.bf16.mxu0 0
    %316 = vmatpush1.bf16.msra.mxu0 0
    %317 = vmatprep.subr.bf16.mxu0 0
    %318 = vmatpush1.bf16.msra.mxu0 0
    %319 = vmatprep.subr.bf16.mxu0 0
    %320 = vmatpush1.bf16.msra.mxu0 0
    %321 = vmatprep.subr.bf16.mxu0 0
    %322 = vmatpush1.bf16.msra.mxu0 0
    %323 = vmatprep.mubr.bf16.mxu0 0
    %324 = vmatmul.mubr.bf16.gmra.mrb[0].mxu0 %v226
    %v325 = vpop.f32.mrb[0].mxu0
    %v326 = vadd.f32 0.0, %v325
    %v327 = vpop.f32.mrb[0].mxu0
    %v328 = vpop.f32.mrb[0].mxu0
    %v329 = vpop.f32.mrb[0].mxu0
    %330 = vdwg.mxu0
    %v331 = vrcp.pop %v326
    %v332 = vmul.f32 %v225, %v331
    %333 = vst [vmem:[#allocation8] sm:$0x1] %v332
    %v334 = vmul.f32 %v332, %v32
    %335 = vst [vmem:[#allocation7] sm:$0x1] %v334
    // Predicated region
    $region14: #{tpu_custom_call.1} parent=1 // pred_check
      _
    $region15: #{tpu_custom_call.1} parent=1 // pred_check_branch
      %337 = sbr.rel (0) target = $region17
    $region16: #{tpu_custom_call.1} parent=1 // pred_region
      %s339 = ssub.s32 16, 16
      %340 = vsyncadd [#allocation6], %s339
      %s342 = sshll.u32 [#allocation7], 4
      %s343 = int_to_ptr.vmem [resolvable:$true] %s342
      %345 = dma.vmem_to_hbm [thread:$0]  %s343, 16, %s3, [#allocation6]
    $region17: #{tpu_custom_call.1} parent=1 // pred_fallthru
      _
    // Predicated region
    $region18: #{tpu_custom_call.1} parent=1 // pred_check
      _
    $region19: #{tpu_custom_call.1} parent=1 // pred_check_branch
      %347 = sbr.rel (0) target = $region21
    $region20: #{tpu_custom_call.1} parent=1 // pred_region
      %s349 = ssub.s32 16, 16
      %350 = vsyncadd [#allocation9], %s349
      %s352 = sshll.u32 [#allocation8], 4
      %s353 = int_to_ptr.vmem [resolvable:$true] %s352
      %355 = dma.vmem_to_hbm [thread:$0]  %s353, 16, %s4, [#allocation9]
    $region21: #{tpu_custom_call.1} parent=1 // pred_fallthru
      _
    // Predicated region
    $region22: #{tpu_custom_call.1} parent=1 // pred_check
      _
    $region23: #{tpu_custom_call.1} parent=1 // pred_check_branch
      %357 = sbr.rel (0) target = $region25
    $region24: #{tpu_custom_call.1} parent=1 // pred_region
      %358 = dma.done [#allocation6], 16
    $region25: #{tpu_custom_call.1} parent=1 // pred_fallthru
      _
    // Predicated region
    $region26: #{tpu_custom_call.1} parent=1 // pred_check
      _
    $region27: #{tpu_custom_call.1} parent=1 // pred_check_branch
      %360 = sbr.rel (0) target = $region29
    $region28: #{tpu_custom_call.1} parent=1 // pred_region
      %361 = dma.done [#allocation9], 16
    $region29: #{tpu_custom_call.1} parent=1 // pred_fallthru
      _
    %362 = vsyncpa [#allocation5], 1
    %363 = vsyncpa [#allocation6], 1
    %364 = vsyncpa [#allocation9], 1

// kernel: tpu_custom_call.1
$region0: #{tpu_custom_call.1}
  #allocation0 [shape = 'u32[]', space=smem, size = 0x4, offset = 0x4, fixed_abs, tag = 'smem constant byte address 0x4 - core index']
  #allocation1 [shape = 'u32[144,128]{1,0:T(1,128)}', space=vmem, size = 0x12000, scoped, tag = 'internal scratch']
  #allocation2 [shape = 's32[1]{0}', space=sflag, size = 0x4, scoped, tag = 'scoped memory for tpu_custom_call.1']
  #allocation3 [shape = 's32[1]{0:T(128)S(6)}', space=smem, size = 0x200, scoped, tag = 'prefetched SMEM operand 0']
  %s0 = inlined_call_operand.<no memory space> [shape: s32[1], index: 0, kind: input, shape index: {}]
  %s1 = inlined_call_operand.hbm [shape: bf16[128,128], index: 1, kind: input, shape index: {}]
  %s2 = inlined_call_operand.vmem [shape: f32[4,128], index: 2, kind: input, shape index: {}]
  %s3 = inlined_call_operand.vmem [shape: f32[4,128], index: 3, kind: input, shape index: {}]
  %s4 = inlined_call_operand.hbm [shape: f32[4,128], index: 4, kind: output, shape index: {0}]
  %s5 = inlined_call_operand.hbm [shape: f32[4,128], index: 5, kind: output, shape index: {1}]
  %6 = xla_tuple %s4, %s5
  %s7 = sld [smem:[#allocation0]]
  $region34: #{tpu_custom_call.1} parent=0
    _
  %s9 = ssub.s32 1, %s7
  %s10 = scalar_select 0, %s9, %s7
  %11 = sst [smem:[#allocation3]] %s0
  $region1: #{tpu_custom_call.1} parent=0
    #allocation4 [shape = 'u8[32768]{0}', space=vmem, size = 0x8000, scoped, tag = 'input window, operand 1, single buffered']
    #allocation5 [shape = 's32[1]{0}', space=sflag, size = 0x4, scoped, tag = 'scoped memory for tpu_custom_call.1']
    #allocation6 [shape = 's32[1]{0}', space=sflag, size = 0x4, scoped, tag = 'scoped memory for tpu_custom_call.1']
    #allocation7 [shape = 'u8[2048]{0}', space=vmem, size = 0x800, scoped, tag = 'output window, operand 0, single buffered']
    #allocation8 [shape = 'u8[2048]{0}', space=vmem, size = 0x800, scoped, tag = 'output window, operand 1, single buffered']
    #allocation9 [shape = 's32[1]{0}', space=sflag, size = 0x4, scoped, tag = 'scoped memory for tpu_custom_call.1']
    %12 = vsyncpa [#allocation5], 0
    %13 = vsyncpa [#allocation6], 0
    %14 = vsyncpa [#allocation9], 0
    // Predicated region
    $region2: #{tpu_custom_call.1} parent=1 // pred_check
      _
    $region3: #{tpu_custom_call.1} parent=1 // pred_check_branch
      %16 = sbr.rel (0) target = $region5
    $region4: #{tpu_custom_call.1} parent=1 // pred_region
      %s18 = ssub.s32 1024, 1024
      %19 = vsyncadd [#allocation5], %s18
      %s20 = sshll.u32 [#allocation4], 4
      %s21 = int_to_ptr.vmem [resolvable:$true] %s20
      %26 = dma.hbm_to_vmem [thread:$0]  %s1, 1024, %s21, [#allocation5], 64, 64, 4
    $region5: #{tpu_custom_call.1} parent=1 // pred_fallthru
      _
    // Predicated region
    $region6: #{tpu_custom_call.1} parent=1 // pred_check
      _
    $region7: #{tpu_custom_call.1} parent=1 // pred_check_branch
      %28 = sbr.rel (0) target = $region9
    $region8: #{tpu_custom_call.1} parent=1 // pred_region
      _
    $region9: #{tpu_custom_call.1} parent=1 // pred_fallthru
      _
    // Predicated region
    $region10: #{tpu_custom_call.1} parent=1 // pred_check
      _
    $region11: #{tpu_custom_call.1} parent=1 // pred_check_branch
      %30 = sbr.rel (0) target = $region13
    $region12: #{tpu_custom_call.1} parent=1 // pred_region
      _
    $region13: #{tpu_custom_call.1} parent=1 // pred_fallthru
      _
    // Predicated region
    $region14: #{tpu_custom_call.1} parent=1 // pred_check
      _
    $region15: #{tpu_custom_call.1} parent=1 // pred_check_branch
      %32 = sbr.rel (0) target = $region17
    $region16: #{tpu_custom_call.1} parent=1 // pred_region
      %33 = dma.done [#allocation5], 1024
    $region17: #{tpu_custom_call.1} parent=1 // pred_fallthru
      _
    %v35 = vld [vmem:[%s3] sm:$0xf]
    %v36 = vld [vmem:[%s2] sm:$0xf]
    %vm37 = vcmask 1043456
    %v38 = vsel %vm37, %v36, -inf
    %39 = vmax.xlane.f32.xlu0 %v38
    %v40 = vpop.xlane.xlu0 %39
    %v41 = vsub.f32 %v36, %v40
    %v42 = vmul.f32 %v41, 1.442695
    %v43 = vpow.pop %v42
    %v44 = vpack.c.bf16 %v43, %v43
    %v45 = vld [vmem:[#allocation4] sm:$0xf]
    %v46 = vld [vmem:[#allocation4 + $0x4] sm:$0xf]
    %v47 = vld [vmem:[#allocation4 + $0x8] sm:$0xf]
    %v48 = vld [vmem:[#allocation4 + $0xc] sm:$0xf]
    %v49 = vld [vmem:[#allocation4 + $0x10] sm:$0xf]
    %v50 = vld [vmem:[#allocation4 + $0x14] sm:$0xf]
    %v51 = vld [vmem:[#allocation4 + $0x18] sm:$0xf]
    %v52 = vld [vmem:[#allocation4 + $0x1c] sm:$0xf]
    %v53 = vld [vmem:[#allocation4 + $0x20] sm:$0xf]
    %v54 = vld [vmem:[#allocation4 + $0x24] sm:$0xf]
    %v55 = vld [vmem:[#allocation4 + $0x28] sm:$0xf]
    %v56 = vld [vmem:[#allocation4 + $0x2c] sm:$0xf]
    %v57 = vld [vmem:[#allocation4 + $0x30] sm:$0xf]
    %v58 = vld [vmem:[#allocation4 + $0x34] sm:$0xf]
    %v59 = vld [vmem:[#allocation4 + $0x38] sm:$0xf]
    %v60 = vld [vmem:[#allocation4 + $0x3c] sm:$0xf]
    %v77 = vunpack.c.l.b16 %v45
    %v78 = vunpack.c.l.b16 %v46
    %v79 = vunpack.c.l.b16 %v47
    %v80 = vunpack.c.l.b16 %v48
    %v81 = vunpack.c.l.b16 %v49
    %v82 = vunpack.c.l.b16 %v50
    %v83 = vunpack.c.l.b16 %v51
    %v84 = vunpack.c.l.b16 %v52
    %v85 = vunpack.c.l.b16 %v53
    %v86 = vunpack.c.l.b16 %v54
    %v87 = vunpack.c.l.b16 %v55
    %v88 = vunpack.c.l.b16 %v56
    %v89 = vunpack.c.l.b16 %v57
    %v90 = vunpack.c.l.b16 %v58
    %v91 = vunpack.c.l.b16 %v59
    %v92 = vunpack.c.l.b16 %v60
    %v93 = vpack.c.b16 %v78, %v77
    %v94 = vpack.c.b16 %v80, %v79
    %v95 = vpack.c.b16 %v82, %v81
    %v96 = vpack.c.b16 %v84, %v83
    %v97 = vpack.c.b16 %v86, %v85
    %v98 = vpack.c.b16 %v88, %v87
    %v99 = vpack.c.b16 %v90, %v89
    %v100 = vpack.c.b16 %v92, %v91
    %109 = vmatprep.subr.bf16.mxu0 0
    %110 = vmatpush1.bf16.msra.mxu0 %v93
    %111 = vmatprep.subr.bf16.mxu0 0
    %112 = vmatpush1.bf16.msra.mxu0 %v94
    %113 = vmatprep.subr.bf16.mxu0 0
    %114 = vmatpush1.bf16.msra.mxu0 %v95
    %115 = vmatprep.subr.bf16.mxu0 0
    %116 = vmatpush1.bf16.msra.mxu0 %v96
    %117 = vmatprep.subr.bf16.mxu0 0
    %118 = vmatpush1.bf16.msra.mxu0 %v97
    %119 = vmatprep.subr.bf16.mxu0 0
    %120 = vmatpush1.bf16.msra.mxu0 %v98
    %121 = vmatprep.subr.bf16.mxu0 0
    %122 = vmatpush1.bf16.msra.mxu0 %v99
    %123 = vmatprep.subr.bf16.mxu0 0
    %124 = vmatpush1.bf16.msra.mxu0 %v100
    %125 = vmatprep.subr.bf16.mxu0 0
    %126 = vmatpush1.bf16.msra.mxu0 0
    %127 = vmatprep.subr.bf16.mxu0 0
    %128 = vmatpush1.bf16.msra.mxu0 0
    %129 = vmatprep.subr.bf16.mxu0 0
    %130 = vmatpush1.bf16.msra.mxu0 0
    %131 = vmatprep.subr.bf16.mxu0 0
    %132 = vmatpush1.bf16.msra.mxu0 0
    %133 = vmatprep.subr.bf16.mxu0 0
    %134 = vmatpush1.bf16.msra.mxu0 0
    %135 = vmatprep.subr.bf16.mxu0 0
    %136 = vmatpush1.bf16.msra.mxu0 0
    %137 = vmatprep.subr.bf16.mxu0 0
    %138 = vmatpush1.bf16.msra.mxu0 0
    %139 = vmatprep.subr.bf16.mxu0 0
    %140 = vmatpush1.bf16.msra.mxu0 0
    %141 = vmatprep.mubr.bf16.mxu0 0
    %142 = vmatmul.mubr.bf16.gmra.mrb[0].mxu0 %v44
    %v143 = vpop.f32.mrb[0].mxu0
    %v144 = vadd.f32 0.0, %v143
    %v145 = vpop.f32.mrb[0].mxu0
    %v146 = vpop.f32.mrb[0].mxu0
    %v147 = vpop.f32.mrb[0].mxu0
    %148 = vdwg.mxu0
    %v149 = vrcp.pop %v144
    %v150 = vmul.f32 %v43, %v149
    %151 = vst [vmem:[#allocation8] sm:$0xf] %v150
    %v152 = vmul.f32 %v150, %v35
    %153 = vst [vmem:[#allocation7] sm:$0xf] %v152
    // Predicated region
    $region18: #{tpu_custom_call.1} parent=1 // pred_check
      _
    $region19: #{tpu_custom_call.1} parent=1 // pred_check_branch
      %155 = sbr.rel (0) target = $region21
    $region20: #{tpu_custom_call.1} parent=1 // pred_region
      %s157 = ssub.s32 64, 64
      %158 = vsyncadd [#allocation6], %s157
      %s160 = sshll.u32 [#allocation7], 4
      %s161 = int_to_ptr.vmem [resolvable:$true] %s160
      %163 = dma.vmem_to_hbm [thread:$0]  %s161, 64, %s4, [#allocation6]
    $region21: #{tpu_custom_call.1} parent=1 // pred_fallthru
      _
    // Predicated region
    $region22: #{tpu_custom_call.1} parent=1 // pred_check
      _
    $region23: #{tpu_custom_call.1} parent=1 // pred_check_branch
      %165 = sbr.rel (0) target = $region25
    $region24: #{tpu_custom_call.1} parent=1 // pred_region
      %s167 = ssub.s32 64, 64
      %168 = vsyncadd [#allocation9], %s167
      %s170 = sshll.u32 [#allocation8], 4
      %s171 = int_to_ptr.vmem [resolvable:$true] %s170
      %173 = dma.vmem_to_hbm [thread:$0]  %s171, 64, %s5, [#allocation9]
    $region25: #{tpu_custom_call.1} parent=1 // pred_fallthru
      _
    // Predicated region
    $region26: #{tpu_custom_call.1} parent=1 // pred_check
      _
    $region27: #{tpu_custom_call.1} parent=1 // pred_check_branch
      %175 = sbr.rel (0) target = $region29
    $region28: #{tpu_custom_call.1} parent=1 // pred_region
      %176 = dma.done [#allocation6], 64
    $region29: #{tpu_custom_call.1} parent=1 // pred_fallthru
      _
    // Predicated region
    $region30: #{tpu_custom_call.1} parent=1 // pred_check
      _
    $region31: #{tpu_custom_call.1} parent=1 // pred_check_branch
      %178 = sbr.rel (0) target = $region33
    $region32: #{tpu_custom_call.1} parent=1 // pred_region
      %179 = dma.done [#allocation9], 64
    $region33: #{tpu_custom_call.1} parent=1 // pred_fallthru
      _
    %180 = vsyncpa [#allocation5], 1
    %181 = vsyncpa [#allocation6], 1
    %182 = vsyncpa [#allocation9], 1

</llo_original>
